<compile_context>
chip_gen: v7x
topology: tpu7x:2x2x1
jax: 0.10.0
libtpu: 0.0.40
codegen_flags: <defaults>
</compile_context>

<pallas_src>
import jax
import jax.numpy as jnp
from jax.experimental import pallas as pl
from jax.experimental.pallas import tpu as pltpu

TAM_ENTRADA = 78      # input features (native, streamed as-is)
HIDDEN = 100
OUT = 5

HID_PAD = 128         # hidden 100 -> 128 (lane-aligned, zero-padded: exact math)
TB_MAX = 8192         # max batch-tile rows (amortizes per-grid-step overhead)
BATCH_ALIGN = 16      # bf16-native sublane tile
SPLIT_MIN = 1024      # above this, prefer >=2 grid steps (both TCs on v7x)
VMEM_LIMIT = 48 * 1024 * 1024


def _round_up(n, m):
    return ((n + m - 1) // m) * m


def mlp_kernel(x_ref, w1_ref, b1_ref, w2_ref, b2_ref, o_ref):
    # x_ref : (TB, 78)        f32  (streamed at native width)
    # w1_ref: (78, HID_PAD)   bf16 (VMEM-resident), b1_ref: (1, HID_PAD) f32
    # w2_ref: (HID_PAD, OUT)  bf16 (VMEM-resident), b2_ref: (1, OUT)     f32
    # o_ref : (TB, OUT)       f32
    x = x_ref[...].astype(jnp.bfloat16)          # cast on the VPU (free, HBM-bound kernel)
    # MXU matmul #1, contraction over K=78, f32 accumulation.
    h = jnp.dot(x, w1_ref[...], preferred_element_type=jnp.float32)
    # Bias + ReLU in f32 on the VPU (v5e has no bf16 VPU path).
    h = jnp.maximum(h + b1_ref[...], 0.0)
    # MXU matmul #2 in bf16, f32 accumulation.
    y = jnp.dot(h.astype(jnp.bfloat16), w2_ref[...],
                preferred_element_type=jnp.float32)
    o_ref[...] = (y + b2_ref[...]).astype(o_ref.dtype)


def prepare_params(w1, b1, w2, b2):
    """Pack f32 params into lane-aligned, VMEM-resident bf16/f32 buffers.

    w1: (78, 100), b1: (100,) or (1, 100), w2: (100, 5), b2: (5,) or (1, 5).
    Zero-padding hidden 100 -> 128 is exact: padded hidden lanes are
    ReLU(0 + 0) = 0 and the corresponding w2 rows are zero.
    """
    w1_p = jnp.zeros((TAM_ENTRADA, HID_PAD), jnp.bfloat16)
    w1_p = w1_p.at[:, :HIDDEN].set(w1.astype(jnp.bfloat16))
    b1_p = jnp.zeros((1, HID_PAD), jnp.float32)
    b1_p = b1_p.at[:, :HIDDEN].set(b1.reshape(1, HIDDEN).astype(jnp.float32))
    w2_p = jnp.zeros((HID_PAD, OUT), jnp.bfloat16)
    w2_p = w2_p.at[:HIDDEN, :].set(w2.astype(jnp.bfloat16))
    b2_p = b2.reshape(1, OUT).astype(jnp.float32)
    return w1_p, b1_p, w2_p, b2_p


def mynn_forward(x, w1_p, b1_p, w2_p, b2_p):
    """x: (B, 78) float. Returns (B, OUT) float32."""
    B = x.shape[0]

    # --- tile selection ---------------------------------------------------
    B_pad = _round_up(B, BATCH_ALIGN)
    if B_pad <= TB_MAX:
        if B_pad >= SPLIT_MIN and B_pad % (2 * BATCH_ALIGN) == 0:
            TB = B_pad // 2          # >=2 grid steps -> both TensorCores on v7x
        else:
            TB = B_pad               # single step for small batches
    else:
        TB = TB_MAX
        B_pad = _round_up(B, TB)

    # Pad batch only when it is not already tile-aligned (aligned hot path is
    # copy-free).  Padded rows are sliced off the result.
    if B_pad != B:
        x = jnp.pad(x, ((0, B_pad - B), (0, 0)))

    grid = (B_pad // TB,)

    out = pl.pallas_call(
        mlp_kernel,
        out_shape=jax.ShapeDtypeStruct((B_pad, OUT), jnp.float32),
        grid_spec=pltpu.PrefetchScalarGridSpec(
            num_scalar_prefetch=0,
            grid=grid,
            in_specs=[
                pl.BlockSpec((TB, TAM_ENTRADA), lambda i: (i, 0)),       # x tile (native width)
                pl.BlockSpec((TAM_ENTRADA, HID_PAD), lambda i: (0, 0)),  # w1 resident
                pl.BlockSpec((1, HID_PAD), lambda i: (0, 0)),            # b1 resident
                pl.BlockSpec((HID_PAD, OUT), lambda i: (0, 0)),          # w2 resident
                pl.BlockSpec((1, OUT), lambda i: (0, 0)),                # b2 resident
            ],
            out_specs=pl.BlockSpec((TB, OUT), lambda i: (i, 0)),
        ),
        compiler_params=pltpu.CompilerParams(
            dimension_semantics=("parallel",),   # megacore sharding on v7x
            vmem_limit_bytes=VMEM_LIMIT,
        ),
    )(x, w1_p, b1_p, w2_p, b2_p)

    return out[:B]


def init_params(key):
    # Deterministic init mirroring torch.nn.Linear default:
    # U(-1/sqrt(fan_in), 1/sqrt(fan_in)) for both weights and biases.
    k1, k2, k3, k4 = jax.random.split(key, 4)
    bound1 = 1.0 / jnp.sqrt(jnp.float32(TAM_ENTRADA))
    bound2 = 1.0 / jnp.sqrt(jnp.float32(HIDDEN))
    w1 = jax.random.uniform(k1, (TAM_ENTRADA, HIDDEN), jnp.float32, -bound1, bound1)
    b1 = jax.random.uniform(k2, (1, HIDDEN), jnp.float32, -bound1, bound1)
    w2 = jax.random.uniform(k3, (HIDDEN, OUT), jnp.float32, -bound2, bound2)
    b2 = jax.random.uniform(k4, (1, OUT), jnp.float32, -bound2, bound2)
    return w1, b1, w2, b2


if __name__ == "__main__":
    key = jax.random.PRNGKey(0)
    k_params, k_x = jax.random.split(key)
    w1, b1, w2, b2 = init_params(k_params)
    w1_p, b1_p, w2_p, b2_p = prepare_params(w1, b1, w2, b2)

    for batch in (16, 50):   # aligned batch (copy-free path) + ragged batch (padding path)
        x = jax.random.normal(jax.random.fold_in(k_x, batch),
                              (batch, TAM_ENTRADA), jnp.float32)

        out = jax.block_until_ready(mynn_forward(x, w1_p, b1_p, w2_p, b2_p))
        assert out.shape == (batch, OUT)

        # Pure-JAX reference following the same bf16-storage / f32-accumulate path.
        h_ref = jnp.dot(x.astype(jnp.bfloat16), w1.astype(jnp.bfloat16),
                        preferred_element_type=jnp.float32) + b1
        h_ref = jnp.maximum(h_ref, 0.0)
        ref = jnp.dot(h_ref.astype(jnp.bfloat16), w2.astype(jnp.bfloat16),
                      preferred_element_type=jnp.float32) + b2
        max_err = jnp.max(jnp.abs(out - ref))
        assert jnp.allclose(out, ref, atol=1e-2, rtol=1e-2), (
            f"batch={batch}: max abs err vs bf16 reference = {max_err}")

        # Looser sanity check vs the full-f32 torch-equivalent math.
        ref_f32 = jnp.maximum(x @ w1 + b1, 0.0) @ w2 + b2
        assert jnp.allclose(out, ref_f32, atol=5e-2, rtol=5e-2), (
            f"batch={batch}: mismatch vs f32 reference")

    print("KERNEL_OK")
</pallas_src>

<mosaic_0001>
module attributes {stable_mosaic.version = 11 : i64} {
  func.func @mlp_kernel(%arg0: i32, %arg1: memref<16x78xf32, #tpu.memory_space<vmem>>, %arg2: memref<78x128xbf16, #tpu.memory_space<vmem>>, %arg3: memref<1x128xf32, #tpu.memory_space<vmem>>, %arg4: memref<128x5xbf16, #tpu.memory_space<vmem>>, %arg5: memref<1x5xf32, #tpu.memory_space<vmem>>, %arg6: memref<16x5xf32, #tpu.memory_space<vmem>>) attributes {dimension_semantics = [#tpu.dimension_semantics<parallel>], iteration_bounds = array<i64: 1>, scalar_prefetch = 0 : i64, scratch_operands = 0 : i64, tpu.core_type = #tpu.core_type<tc>, window_params = [{transform_indices = @transform_0, window_bounds = array<i64: 16, 78>}, {pipeline_mode = #tpu.pipeline_mode<synchronous>, transform_indices = @transform_1, window_bounds = array<i64: 78, 128>}, {pipeline_mode = #tpu.pipeline_mode<synchronous>, transform_indices = @transform_2, window_bounds = array<i64: 1, 128>}, {pipeline_mode = #tpu.pipeline_mode<synchronous>, transform_indices = @transform_3, window_bounds = array<i64: 128, 5>}, {pipeline_mode = #tpu.pipeline_mode<synchronous>, transform_indices = @transform_4, window_bounds = array<i64: 1, 5>}, {transform_indices = @transform_5, window_bounds = array<i64: 16, 5>}]} {
    %c0 = arith.constant 0 : index
    %c0_0 = arith.constant 0 : index
    %0 = vector.load %arg1[%c0, %c0_0] : memref<16x78xf32, #tpu.memory_space<vmem>>, vector<16x78xf32>
    %1 = arith.truncf %0 : vector<16x78xf32> to vector<16x78xbf16>
    %c0_1 = arith.constant 0 : index
    %c0_2 = arith.constant 0 : index
    %2 = vector.load %arg2[%c0_1, %c0_2] : memref<78x128xbf16, #tpu.memory_space<vmem>>, vector<78x128xbf16>
    %cst = arith.constant dense<0.000000e+00> : vector<16x128xf32>
    %3 = tpu.matmul %1, %2, %cst {dimension_numbers = #tpu.dot_dimension_numbers<[1], [0], [0], [1], [0, 0, 1, 1], [], []>} : vector<16x78xbf16>, vector<78x128xbf16>, vector<16x128xf32> -> vector<16x128xf32>
    %c0_3 = arith.constant 0 : index
    %c0_4 = arith.constant 0 : index
    %4 = vector.load %arg3[%c0_3, %c0_4] : memref<1x128xf32, #tpu.memory_space<vmem>>, vector<1x128xf32>
    %5 = vector.broadcast %4 : vector<1x128xf32> to vector<16x128xf32>
    %6 = arith.addf %3, %5 : vector<16x128xf32>
    %cst_5 = arith.constant 0.000000e+00 : f32
    %7 = vector.broadcast %cst_5 : f32 to vector<16x128xf32>
    %8 = arith.maximumf %6, %7 : vector<16x128xf32>
    %9 = arith.truncf %8 : vector<16x128xf32> to vector<16x128xbf16>
    %c0_6 = arith.constant 0 : index
    %c0_7 = arith.constant 0 : index
    %10 = vector.load %arg4[%c0_6, %c0_7] : memref<128x5xbf16, #tpu.memory_space<vmem>>, vector<128x5xbf16>
    %cst_8 = arith.constant dense<0.000000e+00> : vector<16x5xf32>
    %11 = tpu.matmul %9, %10, %cst_8 {dimension_numbers = #tpu.dot_dimension_numbers<[1], [0], [0], [1], [0, 0, 1, 1], [], []>} : vector<16x128xbf16>, vector<128x5xbf16>, vector<16x5xf32> -> vector<16x5xf32>
    %c0_9 = arith.constant 0 : index
    %c0_10 = arith.constant 0 : index
    %12 = vector.load %arg5[%c0_9, %c0_10] : memref<1x5xf32, #tpu.memory_space<vmem>>, vector<1x5xf32>
    %13 = vector.broadcast %12 : vector<1x5xf32> to vector<16x5xf32>
    %14 = arith.addf %11, %13 : vector<16x5xf32>
    %c0_11 = arith.constant 0 : index
    %c0_12 = arith.constant 0 : index
    %15 = vector.load %arg6[%c0_11, %c0_12] : memref<16x5xf32, #tpu.memory_space<vmem>>, vector<16x5xf32>
    tpu.vector_store %arg6[%c0_11, %c0_12], %14 {strides = array<i32>} : memref<16x5xf32, #tpu.memory_space<vmem>>, vector<16x5xf32>,
    return
  }
  func.func @transform_0(%arg0: i32) -> (i32, i32) {
    %c0_i32 = arith.constant 0 : i32
    %c0_i32_0 = arith.constant 0 : i32
    return %arg0, %c0_i32 : i32, i32
  }
  func.func @transform_1(%arg0: i32) -> (i32, i32) {
    %c0_i32 = arith.constant 0 : i32
    %c0_i32_0 = arith.constant 0 : i32
    %c0_i32_1 = arith.constant 0 : i32
    return %c0_i32, %c0_i32_0 : i32, i32
  }
  func.func @transform_2(%arg0: i32) -> (i32, i32) {
    %c0_i32 = arith.constant 0 : i32
    %c0_i32_0 = arith.constant 0 : i32
    %c0_i32_1 = arith.constant 0 : i32
    return %c0_i32, %c0_i32_0 : i32, i32
  }
  func.func @transform_3(%arg0: i32) -> (i32, i32) {
    %c0_i32 = arith.constant 0 : i32
    %c0_i32_0 = arith.constant 0 : i32
    %c0_i32_1 = arith.constant 0 : i32
    return %c0_i32, %c0_i32_0 : i32, i32
  }
  func.func @transform_4(%arg0: i32) -> (i32, i32) {
    %c0_i32 = arith.constant 0 : i32
    %c0_i32_0 = arith.constant 0 : i32
    %c0_i32_1 = arith.constant 0 : i32
    return %c0_i32, %c0_i32_0 : i32, i32
  }
  func.func @transform_5(%arg0: i32) -> (i32, i32) {
    %c0_i32 = arith.constant 0 : i32
    %c0_i32_0 = arith.constant 0 : i32
    return %arg0, %c0_i32 : i32, i32
  }
}

</mosaic_0001>

<llo_original>
// kernel: tpu_custom_call.1
$region0: #{tpu_custom_call.1}
  #allocation0 [shape = 'u32[]', space=smem, size = 0x4, offset = 0x4, fixed_abs, tag = 'smem constant byte address 0x4 - core index']
  #allocation1 [shape = 'u32[144,128]{1,0:T(1,128)}', space=vmem, size = 0x12000, scoped, tag = 'internal scratch']
  %s0 = inlined_call_operand.vmem [shape: f32[16,78], index: 0, kind: input, shape index: {}]
  %s1 = inlined_call_operand.vmem [shape: bf16[78,128], index: 1, kind: input, shape index: {}]
  %s2 = inlined_call_operand.vmem [shape: f32[1,128], index: 2, kind: input, shape index: {}]
  %s3 = inlined_call_operand.vmem [shape: bf16[128,5], index: 3, kind: input, shape index: {}]
  %s4 = inlined_call_operand.vmem [shape: f32[1,5], index: 4, kind: input, shape index: {}]
  %s5 = inlined_call_operand.vmem [shape: f32[16,5], index: 5, kind: output, shape index: {}]
  %s6 = sld [smem:[#allocation0]]
  $region30: #{tpu_custom_call.1} parent=0
    _
  %s8 = ssub.s32 1, %s6
  %s9 = scalar_select 0, %s8, %s6
  // Predicated region
  $region2: #{tpu_custom_call.1} parent=0 // pred_check
    _
  $region3: #{tpu_custom_call.1} parent=0 // pred_check_branch
    %11 = sbr.rel (0) target = $region5
  $region4: #{tpu_custom_call.1} parent=0 // pred_region
    _
  $region5: #{tpu_custom_call.1} parent=0 // pred_fallthru
    _
  // Predicated region
  $region6: #{tpu_custom_call.1} parent=0 // pred_check
    _
  $region7: #{tpu_custom_call.1} parent=0 // pred_check_branch
    %13 = sbr.rel (0) target = $region9
  $region8: #{tpu_custom_call.1} parent=0 // pred_region
    _
  $region9: #{tpu_custom_call.1} parent=0 // pred_fallthru
    _
  // Predicated region
  $region10: #{tpu_custom_call.1} parent=0 // pred_check
    _
  $region11: #{tpu_custom_call.1} parent=0 // pred_check_branch
    %15 = sbr.rel (0) target = $region13
  $region12: #{tpu_custom_call.1} parent=0 // pred_region
    _
  $region13: #{tpu_custom_call.1} parent=0 // pred_fallthru
    _
  // Predicated region
  $region14: #{tpu_custom_call.1} parent=0 // pred_check
    _
  $region15: #{tpu_custom_call.1} parent=0 // pred_check_branch
    %17 = sbr.rel (0) target = $region17
  $region16: #{tpu_custom_call.1} parent=0 // pred_region
    _
  $region17: #{tpu_custom_call.1} parent=0 // pred_fallthru
    _
  // Predicated region
  $region18: #{tpu_custom_call.1} parent=0 // pred_check
    _
  $region19: #{tpu_custom_call.1} parent=0 // pred_check_branch
    %19 = sbr.rel (0) target = $region21
  $region20: #{tpu_custom_call.1} parent=0 // pred_region
    _
  $region21: #{tpu_custom_call.1} parent=0 // pred_fallthru
    _
  %v21 = vld [vmem:[%s0] sm:$0xff]
  %v22 = vld [vmem:[%s0 + $0x8] sm:$0xff]
  %v23 = vpack.c.bf16 %v22, %v21
  %v24 = vld [vmem:[%s1] sm:$0xf]
  %v25 = vld [vmem:[%s1 + $0x4] sm:$0xf]
  %v26 = vld [vmem:[%s1 + $0x8] sm:$0xf]
  %v27 = vld [vmem:[%s1 + $0xc] sm:$0xf]
  %v28 = vld [vmem:[%s1 + $0x10] sm:$0xf]
  %v29 = vld [vmem:[%s1 + $0x14] sm:$0xf]
  %v30 = vld [vmem:[%s1 + $0x18] sm:$0xf]
  %v31 = vld [vmem:[%s1 + $0x1c] sm:$0xf]
  %v32 = vld [vmem:[%s1 + $0x20] sm:$0xf]
  %v33 = vld [vmem:[%s1 + $0x24] sm:$0x7]
  %v34 = vld [vmem:[%s2] sm:$0x1]
  %v36 = vlaneseq
  %v37 = vshrl.u32 %v36, 7
  %v38 = vsub.s32 0, %v37
  %v39 = vrot.slane %v34, %v38
  %v51 = vunpack.c.l.b16 %v24
  %v52 = vunpack.c.l.b16 %v25
  %v53 = vunpack.c.l.b16 %v26
  %v54 = vunpack.c.l.b16 %v27
  %v55 = vunpack.c.l.b16 %v28
  %v56 = vunpack.c.l.b16 %v29
  %v57 = vunpack.c.l.b16 %v30
  %v58 = vunpack.c.l.b16 %v31
  %v59 = vunpack.c.l.b16 %v32
  %v60 = vunpack.c.l.b16 %v33
  %v61 = vpack.c.b16 %v52, %v51
  %v62 = vpack.c.b16 %v54, %v53
  %v63 = vpack.c.b16 %v56, %v55
  %v64 = vpack.c.b16 %v58, %v57
  %v65 = vpack.c.b16 %v60, %v59
  %vm70 = vcmask 637952
  %v72 = vsel %vm70, %v23, 0
  %vm74 = vcmask 1046528
  %v76 = vsel %vm74, %v65, 0
  %78 = vmatprep.subr.bf16.mxu0 0
  %79 = vmatpush1.bf16.msra.mxu0 %v61
  %80 = vmatprep.subr.bf16.mxu0 0
  %81 = vmatpush1.bf16.msra.mxu0 %v62
  %82 = vmatprep.subr.bf16.mxu0 0
  %83 = vmatpush1.bf16.msra.mxu0 %v63
  %84 = vmatprep.subr.bf16.mxu0 0
  %85 = vmatpush1.bf16.msra.mxu0 %v64
  %86 = vmatprep.subr.bf16.mxu0 0
  %87 = vmatpush1.bf16.msra.mxu0 %v76
  %88 = vmatprep.subr.bf16.mxu0 0
  %89 = vmatpush1.bf16.msra.mxu0 0
  %90 = vmatprep.subr.bf16.mxu0 0
  %91 = vmatpush1.bf16.msra.mxu0 0
  %92 = vmatprep.subr.bf16.mxu0 0
  %93 = vmatpush1.bf16.msra.mxu0 0
  %94 = vmatprep.subr.bf16.mxu0 0
  %95 = vmatpush1.bf16.msra.mxu0 0
  %96 = vmatprep.subr.bf16.mxu0 0
  %97 = vmatpush1.bf16.msra.mxu0 0
  %98 = vmatprep.subr.bf16.mxu0 0
  %99 = vmatpush1.bf16.msra.mxu0 0
  %100 = vmatprep.subr.bf16.mxu0 0
  %101 = vmatpush1.bf16.msra.mxu0 0
  %102 = vmatprep.subr.bf16.mxu0 0
  %103 = vmatpush1.bf16.msra.mxu0 0
  %104 = vmatprep.subr.bf16.mxu0 0
  %105 = vmatpush1.bf16.msra.mxu0 0
  %106 = vmatprep.subr.bf16.mxu0 0
  %107 = vmatpush1.bf16.msra.mxu0 0
  %108 = vmatprep.subr.bf16.mxu0 0
  %109 = vmatpush1.bf16.msra.mxu0 0
  %110 = vmatprep.mubr.bf16.mxu0 0
  %111 = vmatmul.mubr.bf16.gmra.mrb[0].mxu0 %v72
  %v112 = vpop.f32.mrb[0].mxu0
  %v113 = vadd.f32 %v39, %v112
  %v114 = vpop.f32.mrb[0].mxu0
  %v115 = vpop.f32.mrb[0].mxu0
  %v116 = vadd.f32 %v39, %v115
  %v117 = vpop.f32.mrb[0].mxu0
  %118 = vdwg.mxu0
  %v119 = vmax.f32 %v113, 0.0
  %v120 = vmax.f32 %v116, 0.0
  %v121 = vpack.c.bf16 %v120, %v119
  %v122 = vld [vmem:[%s3] sm:$0xf]
  %v123 = vld [vmem:[%s3 + $0x4] sm:$0xf]
  %v124 = vld [vmem:[%s3 + $0x8] sm:$0xf]
  %v125 = vld [vmem:[%s3 + $0xc] sm:$0xf]
  %v126 = vld [vmem:[%s3 + $0x10] sm:$0xf]
  %v127 = vld [vmem:[%s3 + $0x14] sm:$0xf]
  %v128 = vld [vmem:[%s3 + $0x18] sm:$0xf]
  %v129 = vld [vmem:[%s3 + $0x1c] sm:$0xf]
  %v130 = vld [vmem:[%s3 + $0x20] sm:$0xf]
  %v131 = vld [vmem:[%s3 + $0x24] sm:$0xf]
  %v132 = vld [vmem:[%s3 + $0x28] sm:$0xf]
  %v133 = vld [vmem:[%s3 + $0x2c] sm:$0xf]
  %v134 = vld [vmem:[%s3 + $0x30] sm:$0xf]
  %v135 = vld [vmem:[%s3 + $0x34] sm:$0xf]
  %v136 = vld [vmem:[%s3 + $0x38] sm:$0xf]
  %v137 = vld [vmem:[%s3 + $0x3c] sm:$0xf]
  %v138 = vld [vmem:[%s4] sm:$0x1]
  %v140 = vlaneseq
  %v141 = vshrl.u32 %v140, 7
  %v142 = vsub.s32 0, %v141
  %v143 = vrot.slane %v138, %v142
  %v161 = vunpack.c.l.b16 %v122
  %v162 = vunpack.c.l.b16 %v123
  %v163 = vunpack.c.l.b16 %v124
  %v164 = vunpack.c.l.b16 %v125
  %v165 = vunpack.c.l.b16 %v126
  %v166 = vunpack.c.l.b16 %v127
  %v167 = vunpack.c.l.b16 %v128
  %v168 = vunpack.c.l.b16 %v129
  %v169 = vunpack.c.l.b16 %v130
  %v170 = vunpack.c.l.b16 %v131
  %v171 = vunpack.c.l.b16 %v132
  %v172 = vunpack.c.l.b16 %v133
  %v173 = vunpack.c.l.b16 %v134
  %v174 = vunpack.c.l.b16 %v135
  %v175 = vunpack.c.l.b16 %v136
  %v176 = vunpack.c.l.b16 %v137
  %v177 = vpack.c.b16 %v162, %v161
  %v178 = vpack.c.b16 %v164, %v163
  %v179 = vpack.c.b16 %v166, %v165
  %v180 = vpack.c.b16 %v168, %v167
  %v181 = vpack.c.b16 %v170, %v169
  %v182 = vpack.c.b16 %v172, %v171
  %v183 = vpack.c.b16 %v174, %v173
  %v184 = vpack.c.b16 %v176, %v175
  %193 = vmatprep.subr.bf16.mxu0 0
  %194 = vmatpush1.bf16.msra.mxu0 %v177
  %195 = vmatprep.subr.bf16.mxu0 0
  %196 = vmatpush1.bf16.msra.mxu0 %v178
  %197 = vmatprep.subr.bf16.mxu0 0
  %198 = vmatpush1.bf16.msra.mxu0 %v179
  %199 = vmatprep.subr.bf16.mxu0 0
  %200 = vmatpush1.bf16.msra.mxu0 %v180
  %201 = vmatprep.subr.bf16.mxu0 0
  %202 = vmatpush1.bf16.msra.mxu0 %v181
  %203 = vmatprep.subr.bf16.mxu0 0
  %204 = vmatpush1.bf16.msra.mxu0 %v182
  %205 = vmatprep.subr.bf16.mxu0 0
  %206 = vmatpush1.bf16.msra.mxu0 %v183
  %207 = vmatprep.subr.bf16.mxu0 0
  %208 = vmatpush1.bf16.msra.mxu0 %v184
  %209 = vmatprep.subr.bf16.mxu0 0
  %210 = vmatpush1.bf16.msra.mxu0 0
  %211 = vmatprep.subr.bf16.mxu0 0
  %212 = vmatpush1.bf16.msra.mxu0 0
  %213 = vmatprep.subr.bf16.mxu0 0
  %214 = vmatpush1.bf16.msra.mxu0 0
  %215 = vmatprep.subr.bf16.mxu0 0
  %216 = vmatpush1.bf16.msra.mxu0 0
  %217 = vmatprep.subr.bf16.mxu0 0
  %218 = vmatpush1.bf16.msra.mxu0 0
  %219 = vmatprep.subr.bf16.mxu0 0
  %220 = vmatpush1.bf16.msra.mxu0 0
  %221 = vmatprep.subr.bf16.mxu0 0
  %222 = vmatpush1.bf16.msra.mxu0 0
  %223 = vmatprep.subr.bf16.mxu0 0
  %224 = vmatpush1.bf16.msra.mxu0 0
  %225 = vmatprep.mubr.bf16.mxu0 0
  %226 = vmatmul.mubr.bf16.gmra.mrb[0].mxu0 %v121
  %v227 = vpop.f32.mrb[0].mxu0
  %v228 = vadd.f32 %v143, %v227
  %v229 = vpop.f32.mrb[0].mxu0
  %v230 = vpop.f32.mrb[0].mxu0
  %v231 = vadd.f32 %v143, %v230
  %v232 = vpop.f32.mrb[0].mxu0
  %233 = vdwg.mxu0
  %vm234 = vcmask 39936
  %235 = vst.msk [vmem:[%s5] sm:$0xff] %vm234, %v228
  %236 = vst.msk [vmem:[%s5 + $0x8] sm:$0xff] %vm234, %v231
  // Predicated region
  $region22: #{tpu_custom_call.1} parent=0 // pred_check
    _
  $region23: #{tpu_custom_call.1} parent=0 // pred_check_branch
    %238 = sbr.rel (0) target = $region25
  $region24: #{tpu_custom_call.1} parent=0 // pred_region
    _
  $region25: #{tpu_custom_call.1} parent=0 // pred_fallthru
    _
  // Predicated region
  $region26: #{tpu_custom_call.1} parent=0 // pred_check
    _
  $region27: #{tpu_custom_call.1} parent=0 // pred_check_branch
    %240 = sbr.rel (0) target = $region29
  $region28: #{tpu_custom_call.1} parent=0 // pred_region
    _
  $region29: #{tpu_custom_call.1} parent=0 // pred_fallthru
    _

</llo_original>
